<compile_context>
chip_gen: v5e
topology: v5e:2x2
jax: 0.10.0
libtpu: 0.0.40
codegen_flags: <defaults>
</compile_context>

<pallas_src>
import functools

import jax
import jax.numpy as jnp
import numpy as np
from jax.experimental import pallas as pl
from jax.experimental.pallas import tpu as pltpu

LN_EPS = 1e-5  # torch.nn.LayerNorm default

# Rows of the packed per-feature-vector slab.
_ROW_B1, _ROW_G1, _ROW_BT1, _ROW_B2, _ROW_G2, _ROW_BT2, _ROW_B3, _ROW_PAD = range(8)


def actor_kernel(x_ref, w1_ref, w2_ref, w3_ref, vec_ref, o_ref, *, approx_recip):
    adim = o_ref.shape[-1]

    # Single small load for all bias / LayerNorm vectors, then static row slices.
    vec = vec_ref[...]                       # (8, hidden) f32
    b1, g1, bt1 = vec[_ROW_B1:_ROW_B1 + 1], vec[_ROW_G1:_ROW_G1 + 1], vec[_ROW_BT1:_ROW_BT1 + 1]
    b2, g2, bt2 = vec[_ROW_B2:_ROW_B2 + 1], vec[_ROW_G2:_ROW_G2 + 1], vec[_ROW_BT2:_ROW_BT2 + 1]
    b3 = vec[_ROW_B3:_ROW_B3 + 1, :adim]

    def linear(h, w_ref, b):
        # MXU matmul in the weight's dtype (f32 or bf16), always f32 accumulation.
        return jnp.dot(h.astype(w_ref.dtype), w_ref[...],
                       preferred_element_type=jnp.float32) + b

    def ln_relu(h, gamma, beta):
        # One-pass LN statistics: the two reductions are independent (overlap on XLU),
        # var = E[h^2] - mu^2.  All LN math in f32.
        mu = jnp.mean(h, axis=-1, keepdims=True)
        ms = jnp.mean(h * h, axis=-1, keepdims=True)
        inv = jax.lax.rsqrt(ms - mu * mu + LN_EPS)
        return jnp.maximum((h - mu) * (inv * gamma) + beta, 0.0)

    # Layer 1 (f32 weights/inputs: preserves observation precision, K=16 so it's cheap).
    h = ln_relu(linear(x_ref[...], w1_ref, b1), g1, bt1)
    # Layer 2.
    h = ln_relu(linear(h, w2_ref, b2), g2, bt2)
    # Output layer + softmax over last dim (f32).
    logits = linear(h, w3_ref, b3)
    m = jnp.max(logits, axis=-1, keepdims=True)
    e = jnp.exp(logits - m)
    denom = jnp.sum(e, axis=-1, keepdims=True)
    if approx_recip:
        # EUP vrcp (free slot); probabilities then sum to 1 only to ~1e-3.
        o_ref[...] = e * pl.reciprocal(denom, approx=True)
    else:
        o_ref[...] = e / denom
    # NOTE: action_dim < 128 -> masked partial store; negligible at this output volume.
    # TODO(synk): if reused at large batch/hidden, pad w3/b3 to N=128 (zero weights,
    # -inf pad bias), softmax over 128 lanes and slice outside for lane-dense stores.


def _default_num_batch_tiles():
    """2 batch tiles on chips whose 'parallel' grid axis spans 2 TensorCores (v7x,
    v4/v5p megacore); 1 tile on single-TC chips (v5e/v6e) where extra steps are
    pure serial overhead."""
    try:
        kind = jax.devices()[0].device_kind.lower()
    except Exception:
        return 1
    if any(t in kind for t in ("v5 lite", "v5e", "v5lite", "v6 lite", "v6e", "v6lite")):
        return 1
    return 2


@functools.partial(jax.jit, static_argnames=("num_batch_tiles", "approx_recip"))
def actor_forward(x, prepared_params, num_batch_tiles=None, approx_recip=False):
    w1, w2, w3, vec = prepared_params
    B, obs_dim = x.shape
    action_dim = w3.shape[1]

    if num_batch_tiles is None:
        num_batch_tiles = _default_num_batch_tiles()
    # Fall back to a single tile unless the split is (8,*)-tileable and exact.
    if (num_batch_tiles < 1 or B % num_batch_tiles != 0
            or (num_batch_tiles > 1 and (B // num_batch_tiles) % 8 != 0)):
        num_batch_tiles = 1
    block_b = B // num_batch_tiles

    def rep(a):
        # Replicated parameter: full block, constant index.
        # TODO(synk): if hidden_dim is scaled so weights become multi-MiB (v7x has only
        # 64 MiB VMEM), add pipeline_mode=pl.Buffered(1) here to avoid double-buffering
        # these grid-invariant params.
        return pl.BlockSpec(a.shape, lambda i: (0, 0))

    in_specs = [
        pl.BlockSpec((block_b, obs_dim), lambda i: (i, 0)),   # x: tiled over batch
        rep(w1), rep(w2), rep(w3), rep(vec),
    ]
    out_specs = pl.BlockSpec((block_b, action_dim), lambda i: (i, 0))

    kernel = functools.partial(actor_kernel, approx_recip=approx_recip)

    return pl.pallas_call(
        kernel,
        out_shape=jax.ShapeDtypeStruct((B, action_dim), jnp.float32),
        grid=(num_batch_tiles,),
        in_specs=in_specs,
        out_specs=out_specs,
        compiler_params=pltpu.CompilerParams(
            dimension_semantics=("parallel",),      # batch tiles across v7x's 2 TCs
            vmem_limit_bytes=32 * 1024 * 1024,      # explicit budget, safe on v5e/v6e/v7x
        ),
    )(x, w1, w2, w3, vec)


def init_actor_params(key, obs_dim, action_dim, hidden_dim):
    """Matches the module init: orthogonal(gain=sqrt(2)) weights, zero bias, LN gamma=1/beta=0."""
    k1, k2, k3 = jax.random.split(key, 3)
    ortho = jax.nn.initializers.orthogonal(scale=np.sqrt(2.0))
    w1 = ortho(k1, (obs_dim, hidden_dim), jnp.float32)       # stored [in, out]
    w2 = ortho(k2, (hidden_dim, hidden_dim), jnp.float32)
    w3 = ortho(k3, (hidden_dim, action_dim), jnp.float32)
    b1 = jnp.zeros((hidden_dim,), jnp.float32)
    b2 = jnp.zeros((hidden_dim,), jnp.float32)
    b3 = jnp.zeros((action_dim,), jnp.float32)
    g1 = jnp.ones((hidden_dim,), jnp.float32)
    bt1 = jnp.zeros((hidden_dim,), jnp.float32)
    g2 = jnp.ones((hidden_dim,), jnp.float32)
    bt2 = jnp.zeros((hidden_dim,), jnp.float32)
    return (w1, b1, g1, bt1, w2, b2, g2, bt2, w3, b3)


def prepare_actor_params(params, use_bf16=True):
    """One-time packing / casting (outside the per-call path).

    * w2/w3 stored in bf16 on the fast path (MXU takes bf16; f32 accumulation in-kernel).
      w1 stays f32 so the first layer keeps full observation precision (K=16, negligible cost).
    * The 7 tiny per-feature vectors are packed into one (8, hidden) f32 slab so the kernel
      gets a single small-DMA input instead of seven.
    """
    (w1, b1, g1, bt1, w2, b2, g2, bt2, w3, b3) = params
    hidden = w1.shape[1]
    assert w3.shape[1] <= hidden

    def row(v):
        v = jnp.asarray(v, jnp.float32).reshape(-1)
        return jnp.pad(v, (0, hidden - v.shape[0]))

    vec = jnp.stack([row(b1), row(g1), row(bt1),
                     row(b2), row(g2), row(bt2),
                     row(b3), jnp.zeros((hidden,), jnp.float32)], axis=0)  # (8, hidden)

    wdt = jnp.bfloat16 if use_bf16 else jnp.float32
    return (w1.astype(jnp.float32), w2.astype(wdt), w3.astype(wdt), vec)


def actor_reference(x, params):
    """Pure-JAX reference matching the PyTorch module (f32 everywhere)."""
    (w1, b1, g1, bt1, w2, b2, g2, bt2, w3, b3) = params
    hi = jax.lax.Precision.HIGHEST

    def ln(h, g, b):
        mu = jnp.mean(h, axis=-1, keepdims=True)
        var = jnp.mean((h - mu) ** 2, axis=-1, keepdims=True)
        return (h - mu) / jnp.sqrt(var + LN_EPS) * g + b

    h = jnp.maximum(ln(jnp.dot(x, w1, precision=hi) + b1, g1, bt1), 0.0)
    h = jnp.maximum(ln(jnp.dot(h, w2, precision=hi) + b2, g2, bt2), 0.0)
    return jax.nn.softmax(jnp.dot(h, w3, precision=hi) + b3, axis=-1)


if __name__ == "__main__":
    obs_dim, action_dim, hidden_dim = 16, 8, 256   # hidden_dim = module default
    batch = 64                                     # small; splits into 2 tiles of 32 on v7x

    key = jax.random.PRNGKey(0)
    kx, kp = jax.random.split(key)
    x = jax.random.normal(kx, (batch, obs_dim), dtype=jnp.float32)
    params = init_actor_params(kp, obs_dim, action_dim, hidden_dim)
    ref = actor_reference(x, params)

    # 1) Exact-f32 path: matches the PyTorch module numerics; probabilities sum to 1.
    prep_f32 = prepare_actor_params(params, use_bf16=False)
    out_f32 = jax.block_until_ready(actor_forward(x, prep_f32, approx_recip=False))
    np.testing.assert_allclose(np.asarray(out_f32), np.asarray(ref), rtol=1e-3, atol=1e-4)
    np.testing.assert_allclose(np.asarray(out_f32).sum(-1), np.ones(batch), rtol=1e-5, atol=1e-5)

    # 2) Fast path (default): bf16-stored w2/w3 (cast once, not per call), exact divide.
    prep_bf16 = prepare_actor_params(params, use_bf16=True)
    out = jax.block_until_ready(actor_forward(x, prep_bf16))
    np.testing.assert_allclose(np.asarray(out), np.asarray(ref), rtol=0.0, atol=0.05)
    np.testing.assert_allclose(np.asarray(out).sum(-1), np.ones(batch), rtol=1e-5, atol=1e-5)

    # 3) Optional approx-reciprocal softmax denominator (independent knob; sums ~1 +/- 1e-3).
    out_ar = jax.block_until_ready(actor_forward(x, prep_bf16, approx_recip=True))
    np.testing.assert_allclose(np.asarray(out_ar), np.asarray(ref), rtol=0.0, atol=0.05)
    np.testing.assert_allclose(np.asarray(out_ar).sum(-1), np.ones(batch), rtol=5e-3, atol=5e-3)

    print("KERNEL_OK")
</pallas_src>

<mosaic_0001>
module attributes {stable_mosaic.version = 11 : i64} {
  func.func @actor_kernel(%arg0: i32, %arg1: memref<32x16xf32, #tpu.memory_space<vmem>>, %arg2: memref<16x256xf32, #tpu.memory_space<vmem>>, %arg3: memref<256x256xf32, #tpu.memory_space<vmem>>, %arg4: memref<256x8xf32, #tpu.memory_space<vmem>>, %arg5: memref<8x256xf32, #tpu.memory_space<vmem>>, %arg6: memref<32x8xf32, #tpu.memory_space<vmem>>) attributes {dimension_semantics = [#tpu.dimension_semantics<parallel>], iteration_bounds = array<i64: 2>, scalar_prefetch = 0 : i64, scratch_operands = 0 : i64, tpu.core_type = #tpu.core_type<tc>, window_params = [{transform_indices = @transform_0, window_bounds = array<i64: 32, 16>}, {pipeline_mode = #tpu.pipeline_mode<synchronous>, transform_indices = @transform_1, window_bounds = array<i64: 16, 256>}, {pipeline_mode = #tpu.pipeline_mode<synchronous>, transform_indices = @transform_2, window_bounds = array<i64: 256, 256>}, {pipeline_mode = #tpu.pipeline_mode<synchronous>, transform_indices = @transform_3, window_bounds = array<i64: 256, 8>}, {pipeline_mode = #tpu.pipeline_mode<synchronous>, transform_indices = @transform_4, window_bounds = array<i64: 8, 256>}, {transform_indices = @transform_5, window_bounds = array<i64: 32, 8>}]} {
    %c0 = arith.constant 0 : index
    %c0_0 = arith.constant 0 : index
    %0 = vector.load %arg5[%c0, %c0_0] : memref<8x256xf32, #tpu.memory_space<vmem>>, vector<8x256xf32>
    %1 = vector.extract_strided_slice %0 {offsets = [0, 0], sizes = [1, 256], strides = [1, 1]} : vector<8x256xf32> to vector<1x256xf32>
    %2 = vector.extract_strided_slice %0 {offsets = [1, 0], sizes = [1, 256], strides = [1, 1]} : vector<8x256xf32> to vector<1x256xf32>
    %3 = vector.extract_strided_slice %0 {offsets = [2, 0], sizes = [1, 256], strides = [1, 1]} : vector<8x256xf32> to vector<1x256xf32>
    %4 = vector.extract_strided_slice %0 {offsets = [3, 0], sizes = [1, 256], strides = [1, 1]} : vector<8x256xf32> to vector<1x256xf32>
    %5 = vector.extract_strided_slice %0 {offsets = [4, 0], sizes = [1, 256], strides = [1, 1]} : vector<8x256xf32> to vector<1x256xf32>
    %6 = vector.extract_strided_slice %0 {offsets = [5, 0], sizes = [1, 256], strides = [1, 1]} : vector<8x256xf32> to vector<1x256xf32>
    %7 = vector.extract_strided_slice %0 {offsets = [6, 0], sizes = [1, 8], strides = [1, 1]} : vector<8x256xf32> to vector<1x8xf32>
    %c0_1 = arith.constant 0 : index
    %c0_2 = arith.constant 0 : index
    %8 = vector.load %arg1[%c0_1, %c0_2] : memref<32x16xf32, #tpu.memory_space<vmem>>, vector<32x16xf32>
    %c0_3 = arith.constant 0 : index
    %c0_4 = arith.constant 0 : index
    %9 = vector.load %arg2[%c0_3, %c0_4] : memref<16x256xf32, #tpu.memory_space<vmem>>, vector<16x256xf32>
    %cst = arith.constant dense<0.000000e+00> : vector<32x256xf32>
    %10 = tpu.matmul %8, %9, %cst {dimension_numbers = #tpu.dot_dimension_numbers<[1], [0], [0], [1], [0, 0, 1, 1], [], []>} : vector<32x16xf32>, vector<16x256xf32>, vector<32x256xf32> -> vector<32x256xf32>
    %11 = vector.broadcast %1 : vector<1x256xf32> to vector<32x256xf32>
    %12 = arith.addf %10, %11 : vector<32x256xf32>
    %cst_5 = arith.constant dense<0.000000e+00> : vector<32xf32>
    %13 = vector.multi_reduction <add>, %12, %cst_5 [1] : vector<32x256xf32> to vector<32xf32>
    %14 = vector.shape_cast %13 : vector<32xf32> to vector<32x1xf32>
    %cst_6 = arith.constant 2.560000e+02 : f32
    %15 = vector.broadcast %cst_6 : f32 to vector<32x1xf32>
    %16 = arith.divf %14, %15 : vector<32x1xf32>
    %17 = arith.mulf %12, %12 : vector<32x256xf32>
    %cst_7 = arith.constant dense<0.000000e+00> : vector<32xf32>
    %18 = vector.multi_reduction <add>, %17, %cst_7 [1] : vector<32x256xf32> to vector<32xf32>
    %19 = vector.shape_cast %18 : vector<32xf32> to vector<32x1xf32>
    %cst_8 = arith.constant 2.560000e+02 : f32
    %20 = vector.broadcast %cst_8 : f32 to vector<32x1xf32>
    %21 = arith.divf %19, %20 : vector<32x1xf32>
    %22 = arith.mulf %16, %16 : vector<32x1xf32>
    %23 = arith.subf %21, %22 : vector<32x1xf32>
    %cst_9 = arith.constant 9.99999974E-6 : f32
    %24 = vector.broadcast %cst_9 : f32 to vector<32x1xf32>
    %25 = arith.addf %23, %24 : vector<32x1xf32>
    %26 = math.rsqrt %25 : vector<32x1xf32>
    %27 = vector.broadcast %16 : vector<32x1xf32> to vector<32x256xf32>
    %28 = arith.subf %12, %27 : vector<32x256xf32>
    %29 = vector.broadcast %26 : vector<32x1xf32> to vector<32x256xf32>
    %30 = vector.broadcast %2 : vector<1x256xf32> to vector<32x256xf32>
    %31 = arith.mulf %29, %30 : vector<32x256xf32>
    %32 = arith.mulf %28, %31 : vector<32x256xf32>
    %33 = vector.broadcast %3 : vector<1x256xf32> to vector<32x256xf32>
    %34 = arith.addf %32, %33 : vector<32x256xf32>
    %cst_10 = arith.constant 0.000000e+00 : f32
    %35 = vector.broadcast %cst_10 : f32 to vector<32x256xf32>
    %36 = arith.maximumf %34, %35 : vector<32x256xf32>
    %c0_11 = arith.constant 0 : index
    %c0_12 = arith.constant 0 : index
    %37 = vector.load %arg3[%c0_11, %c0_12] : memref<256x256xf32, #tpu.memory_space<vmem>>, vector<256x256xf32>
    %cst_13 = arith.constant dense<0.000000e+00> : vector<32x256xf32>
    %38 = tpu.matmul %36, %37, %cst_13 {dimension_numbers = #tpu.dot_dimension_numbers<[1], [0], [0], [1], [0, 0, 1, 1], [], []>} : vector<32x256xf32>, vector<256x256xf32>, vector<32x256xf32> -> vector<32x256xf32>
    %39 = vector.broadcast %4 : vector<1x256xf32> to vector<32x256xf32>
    %40 = arith.addf %38, %39 : vector<32x256xf32>
    %cst_14 = arith.constant dense<0.000000e+00> : vector<32xf32>
    %41 = vector.multi_reduction <add>, %40, %cst_14 [1] : vector<32x256xf32> to vector<32xf32>
    %42 = vector.shape_cast %41 : vector<32xf32> to vector<32x1xf32>
    %cst_15 = arith.constant 2.560000e+02 : f32
    %43 = vector.broadcast %cst_15 : f32 to vector<32x1xf32>
    %44 = arith.divf %42, %43 : vector<32x1xf32>
    %45 = arith.mulf %40, %40 : vector<32x256xf32>
    %cst_16 = arith.constant dense<0.000000e+00> : vector<32xf32>
    %46 = vector.multi_reduction <add>, %45, %cst_16 [1] : vector<32x256xf32> to vector<32xf32>
    %47 = vector.shape_cast %46 : vector<32xf32> to vector<32x1xf32>
    %cst_17 = arith.constant 2.560000e+02 : f32
    %48 = vector.broadcast %cst_17 : f32 to vector<32x1xf32>
    %49 = arith.divf %47, %48 : vector<32x1xf32>
    %50 = arith.mulf %44, %44 : vector<32x1xf32>
    %51 = arith.subf %49, %50 : vector<32x1xf32>
    %cst_18 = arith.constant 9.99999974E-6 : f32
    %52 = vector.broadcast %cst_18 : f32 to vector<32x1xf32>
    %53 = arith.addf %51, %52 : vector<32x1xf32>
    %54 = math.rsqrt %53 : vector<32x1xf32>
    %55 = vector.broadcast %44 : vector<32x1xf32> to vector<32x256xf32>
    %56 = arith.subf %40, %55 : vector<32x256xf32>
    %57 = vector.broadcast %54 : vector<32x1xf32> to vector<32x256xf32>
    %58 = vector.broadcast %5 : vector<1x256xf32> to vector<32x256xf32>
    %59 = arith.mulf %57, %58 : vector<32x256xf32>
    %60 = arith.mulf %56, %59 : vector<32x256xf32>
    %61 = vector.broadcast %6 : vector<1x256xf32> to vector<32x256xf32>
    %62 = arith.addf %60, %61 : vector<32x256xf32>
    %cst_19 = arith.constant 0.000000e+00 : f32
    %63 = vector.broadcast %cst_19 : f32 to vector<32x256xf32>
    %64 = arith.maximumf %62, %63 : vector<32x256xf32>
    %c0_20 = arith.constant 0 : index
    %c0_21 = arith.constant 0 : index
    %65 = vector.load %arg4[%c0_20, %c0_21] : memref<256x8xf32, #tpu.memory_space<vmem>>, vector<256x8xf32>
    %cst_22 = arith.constant dense<0.000000e+00> : vector<32x8xf32>
    %66 = tpu.matmul %64, %65, %cst_22 {dimension_numbers = #tpu.dot_dimension_numbers<[1], [0], [0], [1], [0, 0, 1, 1], [], []>} : vector<32x256xf32>, vector<256x8xf32>, vector<32x8xf32> -> vector<32x8xf32>
    %67 = vector.broadcast %7 : vector<1x8xf32> to vector<32x8xf32>
    %68 = arith.addf %66, %67 : vector<32x8xf32>
    %cst_23 = arith.constant dense<0xFF800000> : vector<32xf32>
    %69 = vector.multi_reduction <maximumf>, %68, %cst_23 [1] : vector<32x8xf32> to vector<32xf32>
    %70 = vector.shape_cast %69 : vector<32xf32> to vector<32x1xf32>
    %71 = vector.broadcast %70 : vector<32x1xf32> to vector<32x8xf32>
    %72 = arith.subf %68, %71 : vector<32x8xf32>
    %73 = math.exp %72 : vector<32x8xf32>
    %cst_24 = arith.constant dense<0.000000e+00> : vector<32xf32>
    %74 = vector.multi_reduction <add>, %73, %cst_24 [1] : vector<32x8xf32> to vector<32xf32>
    %75 = vector.shape_cast %74 : vector<32xf32> to vector<32x1xf32>
    %76 = vector.broadcast %75 : vector<32x1xf32> to vector<32x8xf32>
    %77 = arith.divf %73, %76 : vector<32x8xf32>
    %c0_25 = arith.constant 0 : index
    %c0_26 = arith.constant 0 : index
    %78 = vector.load %arg6[%c0_25, %c0_26] : memref<32x8xf32, #tpu.memory_space<vmem>>, vector<32x8xf32>
    tpu.vector_store %arg6[%c0_25, %c0_26], %77 {strides = array<i32>} : memref<32x8xf32, #tpu.memory_space<vmem>>, vector<32x8xf32>,
    return
  }
  func.func @transform_0(%arg0: i32) -> (i32, i32) {
    %c0_i32 = arith.constant 0 : i32
    %c0_i32_0 = arith.constant 0 : i32
    return %arg0, %c0_i32 : i32, i32
  }
  func.func @transform_1(%arg0: i32) -> (i32, i32) {
    %c0_i32 = arith.constant 0 : i32
    %c0_i32_0 = arith.constant 0 : i32
    %c0_i32_1 = arith.constant 0 : i32
    return %c0_i32, %c0_i32_0 : i32, i32
  }
  func.func @transform_2(%arg0: i32) -> (i32, i32) {
    %c0_i32 = arith.constant 0 : i32
    %c0_i32_0 = arith.constant 0 : i32
    %c0_i32_1 = arith.constant 0 : i32
    return %c0_i32, %c0_i32_0 : i32, i32
  }
  func.func @transform_3(%arg0: i32) -> (i32, i32) {
    %c0_i32 = arith.constant 0 : i32
    %c0_i32_0 = arith.constant 0 : i32
    %c0_i32_1 = arith.constant 0 : i32
    return %c0_i32, %c0_i32_0 : i32, i32
  }
  func.func @transform_4(%arg0: i32) -> (i32, i32) {
    %c0_i32 = arith.constant 0 : i32
    %c0_i32_0 = arith.constant 0 : i32
    %c0_i32_1 = arith.constant 0 : i32
    return %c0_i32, %c0_i32_0 : i32, i32
  }
  func.func @transform_5(%arg0: i32) -> (i32, i32) {
    %c0_i32 = arith.constant 0 : i32
    %c0_i32_0 = arith.constant 0 : i32
    return %arg0, %c0_i32 : i32, i32
  }
}

</mosaic_0001>

<llo_original>
// kernel: actor_forward.1
$region0: #{actor_forward.1}
  #allocation0 [shape = 'u32[]', space=smem, size = 0x4, offset = 0x4, fixed_abs, tag = 'smem constant byte address 0x4 - core index']
  #allocation1 [shape = 'u32[72,128]{1,0:T(1,128)}', space=vmem, size = 0x9000, scoped, tag = 'internal scratch']
  %s0 = inlined_call_operand.vmem [shape: f32[64,16], index: 0, kind: input, shape index: {}]
  %s1 = inlined_call_operand.vmem [shape: f32[16,256], index: 1, kind: input, shape index: {}]
  %s2 = inlined_call_operand.hbm [shape: f32[256,256], index: 2, kind: input, shape index: {}]
  %s3 = inlined_call_operand.vmem [shape: f32[256,8], index: 3, kind: input, shape index: {}]
  %s4 = inlined_call_operand.vmem [shape: f32[8,256], index: 4, kind: input, shape index: {}]
  %s5 = inlined_call_operand.vmem [shape: f32[64,8], index: 5, kind: output, shape index: {}]
  %s6 = sld [smem:[#allocation0]]
  $region57: #{actor_forward.1} parent=0
    _
  %s8 = ssub.s32 1, %s6
  %s9 = scalar_select 0, %s8, %s6
  $region1: #{actor_forward.1} parent=0
    #allocation2 [shape = 'u8[262144]{0}', space=vmem, size = 0x40000, scoped, tag = 'input window, operand 2, single buffered']
    #allocation3 [shape = 's32[2]{0}', space=sflag, size = 0x8, scoped, tag = 'scoped memory for actor_forward.1']
    %10 = vsyncpa [#allocation3], 0
    loop: start=0, step=1, limit=4
    $region2: #{actor_forward.1} parent=1 // loop_pre_header
      _
    $region3: #{actor_forward.1} parent=1 // loop_header
      %s12 = sphi 0, %s16
      %p13 = scmp.ge.s32.totalorder %s12, 4
      %s22 = sphi 0, %s24
      %s25 = sphi 0, %s22
      %s26 = sphi 0, %s25
      %s42 = sphi 0, %s26
      %s46 = sphi 0, %s46
      %s48 = sphi 0, %s46
      %s49 = sphi 0, %s48
      %s63 = sphi 0, %s49
      %s67 = sphi 0, %s67
      %s69 = sphi 0, %s67
      %s70 = sphi 0, %s69
      %s84 = sphi 0, %s70
      %s88 = sphi 0, %s88
      %s90 = sphi 0, %s88
      %s91 = sphi 0, %s90
      %s105 = sphi 0, %s91
      %s109 = sphi 0, %s109
      %s111 = sphi 0, %s109
      %s112 = sphi 0, %s111
      %s126 = sphi 0, %s112
      %s132 = sphi 0, %s134
      %s135 = sphi 0, %s132
      %s136 = sphi 0, %s135
      %s152 = sphi 0, %s136
    $region4: #{actor_forward.1} parent=1 // loop_header_branch
      %15 = sbr.rel (%p13) target = $region8
    $region5: #{actor_forward.1} parent=1 // loop_body
      %s17 = ssub.s32 %s12, 1
      %s18 = ssub.s32 %s12, 2
      %s19 = sadd.s32 %s12, 1
      %s20 = ssub.s32 %s12, %s19
      %p21 = scmp.eq.s32.totalorder %s20, 0
      %s23 = sadd.s32 %s22, 1
      %s24 = scalar_select %p21, %s22, %s23
      %p27 = pneg %p21
      %p28 = scmp.eq.s32.totalorder %s12, 1
      %p29 = por %p27, %p28
      %p30 = scmp.ne.s32.totalorder %s22, %s25
      %p31 = scmp.eq.s32.totalorder %s12, 0
      %p32 = por %p30, %p31
      %p33 = scmp.ne.s32.totalorder %s22, %s25
      %p34 = scmp.eq.s32.totalorder %s17, 1
      %p35 = por %p33, %p34
      %p36 = scmp.ne.s32.totalorder %s25, %s26
      %p37 = scmp.eq.s32.totalorder %s17, 0
      %p38 = por %p36, %p37
      %p39 = scmp.ne.s32.totalorder %s25, %s26
      %p40 = scmp.eq.s32.totalorder %s18, 1
      %p41 = por %p39, %p40
      %p43 = scmp.ne.s32.totalorder %s26, %s42
      %p44 = scmp.eq.s32.totalorder %s18, 0
      %p45 = por %p43, %p44
      %s47 = sadd.s32 %s46, 1
      %p50 = scmp.eq.s32.totalorder %s12, 1
      %p51 = scmp.ne.s32.totalorder %s46, %s48
      %p52 = scmp.eq.s32.totalorder %s12, 0
      %p53 = por %p51, %p52
      %p54 = scmp.ne.s32.totalorder %s46, %s48
      %p55 = scmp.eq.s32.totalorder %s17, 1
      %p56 = por %p54, %p55
      %p57 = scmp.ne.s32.totalorder %s48, %s49
      %p58 = scmp.eq.s32.totalorder %s17, 0
      %p59 = por %p57, %p58
      %p60 = scmp.ne.s32.totalorder %s48, %s49
      %p61 = scmp.eq.s32.totalorder %s18, 1
      %p62 = por %p60, %p61
      %p64 = scmp.ne.s32.totalorder %s49, %s63
      %p65 = scmp.eq.s32.totalorder %s18, 0
      %p66 = por %p64, %p65
      %s68 = sadd.s32 %s67, 1
      %p71 = scmp.eq.s32.totalorder %s12, 1
      %p72 = scmp.ne.s32.totalorder %s67, %s69
      %p73 = scmp.eq.s32.totalorder %s12, 0
      %p74 = por %p72, %p73
      %p75 = scmp.ne.s32.totalorder %s67, %s69
      %p76 = scmp.eq.s32.totalorder %s17, 1
      %p77 = por %p75, %p76
      %p78 = scmp.ne.s32.totalorder %s69, %s70
      %p79 = scmp.eq.s32.totalorder %s17, 0
      %p80 = por %p78, %p79
      %p81 = scmp.ne.s32.totalorder %s69, %s70
      %p82 = scmp.eq.s32.totalorder %s18, 1
      %p83 = por %p81, %p82
      %p85 = scmp.ne.s32.totalorder %s70, %s84
      %p86 = scmp.eq.s32.totalorder %s18, 0
      %p87 = por %p85, %p86
      %s89 = sadd.s32 %s88, 1
      %p92 = scmp.eq.s32.totalorder %s12, 1
      %p93 = scmp.ne.s32.totalorder %s88, %s90
      %p94 = scmp.eq.s32.totalorder %s12, 0
      %p95 = por %p93, %p94
      %p96 = scmp.ne.s32.totalorder %s88, %s90
      %p97 = scmp.eq.s32.totalorder %s17, 1
      %p98 = por %p96, %p97
      %p99 = scmp.ne.s32.totalorder %s90, %s91
      %p100 = scmp.eq.s32.totalorder %s17, 0
      %p101 = por %p99, %p100
      %p102 = scmp.ne.s32.totalorder %s90, %s91
      %p103 = scmp.eq.s32.totalorder %s18, 1
      %p104 = por %p102, %p103
      %p106 = scmp.ne.s32.totalorder %s91, %s105
      %p107 = scmp.eq.s32.totalorder %s18, 0
      %p108 = por %p106, %p107
      %s110 = sadd.s32 %s109, 1
      %p113 = scmp.eq.s32.totalorder %s12, 1
      %p114 = scmp.ne.s32.totalorder %s109, %s111
      %p115 = scmp.eq.s32.totalorder %s12, 0
      %p116 = por %p114, %p115
      %p117 = scmp.ne.s32.totalorder %s109, %s111
      %p118 = scmp.eq.s32.totalorder %s17, 1
      %p119 = por %p117, %p118
      %p120 = scmp.ne.s32.totalorder %s111, %s112
      %p121 = scmp.eq.s32.totalorder %s17, 0
      %p122 = por %p120, %p121
      %p123 = scmp.ne.s32.totalorder %s111, %s112
      %p124 = scmp.eq.s32.totalorder %s18, 1
      %p125 = por %p123, %p124
      %p127 = scmp.ne.s32.totalorder %s112, %s126
      %p128 = scmp.eq.s32.totalorder %s18, 0
      %p129 = por %p127, %p128
      %s130 = ssub.s32 %s12, %s19
      %p131 = scmp.eq.s32.totalorder %s130, 0
      %s133 = sadd.s32 %s132, 1
      %s134 = scalar_select %p131, %s132, %s133
      %p137 = pneg %p131
      %p138 = scmp.eq.s32.totalorder %s12, 1
      %p139 = por %p137, %p138
      %p140 = scmp.ne.s32.totalorder %s132, %s135
      %p141 = scmp.eq.s32.totalorder %s12, 0
      %p142 = por %p140, %p141
      %p143 = scmp.ne.s32.totalorder %s132, %s135
      %p144 = scmp.eq.s32.totalorder %s17, 1
      %p145 = por %p143, %p144
      %p146 = scmp.ne.s32.totalorder %s135, %s136
      %p147 = scmp.eq.s32.totalorder %s17, 0
      %p148 = por %p146, %p147
      %p149 = scmp.ne.s32.totalorder %s135, %s136
      %p150 = scmp.eq.s32.totalorder %s18, 1
      %p151 = por %p149, %p150
      %p153 = scmp.ne.s32.totalorder %s136, %s152
      %p154 = scmp.eq.s32.totalorder %s18, 0
      %p155 = por %p153, %p154
      %p156 = scmp.le.s32.totalorder 1, %s12
      %p157 = scmp.lt.s32.totalorder %s12, 3
      %p158 = pnand %p156, %p157
      %p159 = pneg %p158
      // Predicated region
      $region9: #{actor_forward.1} parent=5 // pred_check
        _
      $region10: #{actor_forward.1} parent=5 // pred_check_branch
        %161 = sbr.rel (%p158) target = $region12
      $region11: #{actor_forward.1} parent=5 // pred_region
        %s162 = ssub.s32 %s12, 1
        // Predicated region
        $region13: #{actor_forward.1} parent=11 // pred_check
          %p163 = pneg %p59
        $region14: #{actor_forward.1} parent=11 // pred_check_branch
          %165 = sbr.rel (%p163) target = $region16
        $region15: #{actor_forward.1} parent=11 // pred_region
          _
        $region16: #{actor_forward.1} parent=11 // pred_fallthru
          _
        // Predicated region
        $region17: #{actor_forward.1} parent=11 // pred_check
          %p166 = pneg %p80
        $region18: #{actor_forward.1} parent=11 // pred_check_branch
          %168 = sbr.rel (%p166) target = $region20
        $region19: #{actor_forward.1} parent=11 // pred_region
          %170 = vsyncadd [#allocation3], 0
          %s171 = sshll.u32 %s2, 4
          %s172 = int_to_ptr.hbm [resolvable:$true] %s171
          %s173 = sshll.u32 [#allocation2], 4
          %s174 = int_to_ptr.vmem [resolvable:$true] %s173
          %179 = dma.hbm_to_vmem [thread:$0]  %s172, 8192, %s174, [#allocation3], 256, 256, 16
        $region20: #{actor_forward.1} parent=11 // pred_fallthru
          _
        // Predicated region
        $region21: #{actor_forward.1} parent=11 // pred_check
          %p180 = pneg %p101
        $region22: #{actor_forward.1} parent=11 // pred_check_branch
          %182 = sbr.rel (%p180) target = $region24
        $region23: #{actor_forward.1} parent=11 // pred_region
          _
        $region24: #{actor_forward.1} parent=11 // pred_fallthru
          _
        // Predicated region
        $region25: #{actor_forward.1} parent=11 // pred_check
          %p183 = pneg %p122
        $region26: #{actor_forward.1} parent=11 // pred_check_branch
          %185 = sbr.rel (%p183) target = $region28
        $region27: #{actor_forward.1} parent=11 // pred_region
          _
        $region28: #{actor_forward.1} parent=11 // pred_fallthru
          _
      $region12: #{actor_forward.1} parent=5 // pred_fallthru
        _
      %p186 = scmp.lt.s32.totalorder %s12, 2
      // Predicated region
      $region29: #{actor_forward.1} parent=5 // pred_check
        %p187 = pneg %p186
      $region30: #{actor_forward.1} parent=5 // pred_check_branch
        %189 = sbr.rel (%p187) target = $region32
      $region31: #{actor_forward.1} parent=5 // pred_region
        // Predicated region
        $region33: #{actor_forward.1} parent=31 // pred_check
          %p190 = pneg %p32
        $region34: #{actor_forward.1} parent=31 // pred_check_branch
          %192 = sbr.rel (%p190) target = $region36
        $region35: #{actor_forward.1} parent=31 // pred_region
          %s193 = smul.u32 4, %s12
          %p194 = scmp.lt.s32.totalorder %s193, 7
          %s195 = scalar_select %p194, %s193, 7
          %s196 = smul.addr %s195, 8
          %s197 = scalar_lea.vmem %s0, %s196
          %s198 = smul.u32 4, %s12
        $region36: #{actor_forward.1} parent=31 // pred_fallthru
          _
      $region32: #{actor_forward.1} parent=5 // pred_fallthru
        _
      %p199 = scmp.le.s32.totalorder 1, %s12
      %p200 = scmp.lt.s32.totalorder %s12, 3
      %p201 = pnand %p199, %p200
      %p202 = pneg %p201
      // Predicated region
      $region37: #{actor_forward.1} parent=5 // pred_check
        _
      $region38: #{actor_forward.1} parent=5 // pred_check_branch
        %204 = sbr.rel (%p201) target = $region40
      $region39: #{actor_forward.1} parent=5 // pred_region
        %s205 = ssub.s32 %s12, 1
        // Predicated region
        $region41: #{actor_forward.1} parent=39 // pred_check
          %p206 = pneg %p80
        $region42: #{actor_forward.1} parent=39 // pred_check_branch
          %208 = sbr.rel (%p206) target = $region44
        $region43: #{actor_forward.1} parent=39 // pred_region
          %210 = dma.done [#allocation3], 8192
        $region44: #{actor_forward.1} parent=39 // pred_fallthru
          _
        %s211 = smul.u32 4, %s17
        %p212 = scmp.lt.s32.totalorder %s211, 7
        %s213 = scalar_select %p212, %s211, 7
        %s214 = smul.addr %s213, 8
        %s215 = scalar_lea.vmem %s0, %s214
        %p216 = pneg %p38
        %p217 = pneg %p35
        %p218 = pneg %p59
        %p219 = pneg %p56
        %p220 = pneg %p80
        %p221 = pneg %p77
        %p222 = pneg %p101
        %p223 = pneg %p98
        %p224 = pneg %p122
        %p225 = pneg %p119
        %p226 = pneg %p148
        %p227 = pneg %p145
        %s228 = smul.u32 4, %s17
        %p229 = scmp.lt.s32.totalorder %s228, 7
        %s230 = scalar_select %p229, %s228, 7
        %s231 = smul.addr %s230, 8
        %s232 = scalar_lea.vmem %s5, %s231
        %s233 = smul.u32 4, %s17
        %p234 = scmp.lt.s32.totalorder %s233, 7
        %s235 = scalar_select %p234, %s233, 7
        %s236 = smul.addr %s235, 8
        %s237 = scalar_lea.vmem %s0, %s236
        %s238 = smul.u32 4, %s17
        %s239 = smul.u32 4, %s17
        %p240 = scmp.lt.s32.totalorder %s239, 7
        %s241 = scalar_select %p240, %s239, 7
        %s242 = smul.addr %s241, 8
        %s243 = scalar_lea.vmem %s5, %s242
        %s244 = smul.u32 4, %s17
        %v245 = vld [vmem:[%s4] sm:$0xff]
        %v246 = vld [vmem:[%s4 + $0x8] sm:$0xff]
        %v247 = vld [vmem:[%s237] sm:$0xff]
        %v248 = vld [vmem:[%s237 + $0x8] sm:$0xff]
        %v249 = vld [vmem:[%s237 + $0x10] sm:$0xff]
        %v250 = vld [vmem:[%s237 + $0x18] sm:$0xff]
        %v251 = vld [vmem:[%s1] sm:$0xff]
        %v252 = vld [vmem:[%s1 + $0x8] sm:$0xff]
        %v253 = vld [vmem:[%s1 + $0x10] sm:$0xff]
        %v254 = vld [vmem:[%s1 + $0x18] sm:$0xff]
        %v255 = vperm.slane %v245, 0
        %v256 = vperm.slane %v246, 0
        %vm257 = vcmask 130048
        %v259 = vsel %vm257, %v247, 0
        %v262 = vsel %vm257, %v248, 0
        %v265 = vsel %vm257, %v249, 0
        %v268 = vsel %vm257, %v250, 0
        %270 = vmatpush.msra.mxu0 0.0
        %271 = vmatpush.msra.mxu0 0.0
        %272 = vmatpush.msra.mxu0 0.0
        %273 = vmatpush.msra.mxu0 0.0
        %274 = vmatpush.msra.mxu0 0.0
        %275 = vmatpush.msra.mxu0 0.0
        %276 = vmatpush.msra.mxu0 0.0
        %277 = vmatpush.msra.mxu0 0.0
        %278 = vmatpush.msra.mxu0 0.0
        %279 = vmatpush.msra.mxu0 0.0
        %280 = vmatpush.msra.mxu0 0.0
        %281 = vmatpush.msra.mxu0 0.0
        %282 = vmatpush.msra.mxu0 0.0
        %283 = vmatpush.msra.mxu0 0.0
        %284 = vmatpush.msra.mxu0 %v253
        %285 = vmatpush.msra.mxu0 %v251
        %286 = vmatmul.f32.gmra.mxu0 %v259
        %v287 = vpop.f32.mrf.mxu0
        %v288 = vadd.f32 %v255, %v287
        %289 = vmatmul.f32.gmra.mxu0 %v262
        %v290 = vpop.f32.mrf.mxu0
        %v291 = vadd.f32 %v255, %v290
        %292 = vmatmul.f32.gmra.mxu0 %v265
        %v293 = vpop.f32.mrf.mxu0
        %v294 = vadd.f32 %v255, %v293
        %295 = vmatmul.f32.gmra.mxu0 %v268
        %v296 = vpop.f32.mrf.mxu0
        %v297 = vadd.f32 %v255, %v296
        %298 = vdwg.mxu0
        %299 = vmatpush.msra.mxu0 0.0
        %300 = vmatpush.msra.mxu0 0.0
        %301 = vmatpush.msra.mxu0 0.0
        %302 = vmatpush.msra.mxu0 0.0
        %303 = vmatpush.msra.mxu0 0.0
        %304 = vmatpush.msra.mxu0 0.0
        %305 = vmatpush.msra.mxu0 0.0
        %306 = vmatpush.msra.mxu0 0.0
        %307 = vmatpush.msra.mxu0 0.0
        %308 = vmatpush.msra.mxu0 0.0
        %309 = vmatpush.msra.mxu0 0.0
        %310 = vmatpush.msra.mxu0 0.0
        %311 = vmatpush.msra.mxu0 0.0
        %312 = vmatpush.msra.mxu0 0.0
        %313 = vmatpush.msra.mxu0 %v254
        %314 = vmatpush.msra.mxu0 %v252
        %315 = vmatmul.f32.gmra.mxu0 %v259
        %v316 = vpop.f32.mrf.mxu0
        %v317 = vadd.f32 %v256, %v316
        %318 = vmatmul.f32.gmra.mxu0 %v262
        %v319 = vpop.f32.mrf.mxu0
        %v320 = vadd.f32 %v256, %v319
        %321 = vmatmul.f32.gmra.mxu0 %v265
        %v322 = vpop.f32.mrf.mxu0
        %v323 = vadd.f32 %v256, %v322
        %324 = vmatmul.f32.gmra.mxu0 %v268
        %v325 = vpop.f32.mrf.mxu0
        %v326 = vadd.f32 %v256, %v325
        %327 = vdwg.mxu0
        %v328 = vadd.f32 %v288, %v317
        %329 = vadd.xlane.f32.xlu0 %v328
        %v330 = vpop.xlane.xlu0 %329
        %v331 = vadd.f32 %v291, %v320
        %332 = vadd.xlane.f32.xlu0 %v331
        %v333 = vpop.xlane.xlu0 %332
        %v334 = vadd.f32 %v294, %v323
        %335 = vadd.xlane.f32.xlu0 %v334
        %v336 = vpop.xlane.xlu0 %335
        %v337 = vadd.f32 %v297, %v326
        %338 = vadd.xlane.f32.xlu0 %v337
        %v339 = vpop.xlane.xlu0 %338
        %v340 = vrcp.pop 256.0
        %v341 = vmul.f32 256.0, %v340
        %v342 = vsub.f32 1.0, %v341
        %v343 = vmul.f32 %v340, %v342
        %v344 = vadd.f32 %v340, %v343
        %vm345 = vweird.f32 %v340
        %v346 = vsel %vm345, %v340, %v344
        %v347 = vmul.f32 %v330, %v346
        %v348 = vmul.f32 %v333, %v346
        %v349 = vmul.f32 %v336, %v346
        %v350 = vmul.f32 %v339, %v346
        %v351 = vmul.f32 %v288, %v288
        %v352 = vmul.f32 %v317, %v317
        %v353 = vmul.f32 %v291, %v291
        %v354 = vmul.f32 %v320, %v320
        %v355 = vmul.f32 %v294, %v294
        %v356 = vmul.f32 %v323, %v323
        %v357 = vmul.f32 %v297, %v297
        %v358 = vmul.f32 %v326, %v326
        %v359 = vadd.f32 %v351, %v352
        %360 = vadd.xlane.f32.xlu0 %v359
        %v361 = vpop.xlane.xlu0 %360
        %v362 = vadd.f32 %v353, %v354
        %363 = vadd.xlane.f32.xlu0 %v362
        %v364 = vpop.xlane.xlu0 %363
        %v365 = vadd.f32 %v355, %v356
        %366 = vadd.xlane.f32.xlu0 %v365
        %v367 = vpop.xlane.xlu0 %366
        %v368 = vadd.f32 %v357, %v358
        %369 = vadd.xlane.f32.xlu0 %v368
        %v370 = vpop.xlane.xlu0 %369
        %v371 = vmul.f32 %v361, %v346
        %v372 = vmul.f32 %v364, %v346
        %v373 = vmul.f32 %v367, %v346
        %v374 = vmul.f32 %v370, %v346
        %v375 = vmul.f32 %v347, %v347
        %v376 = vmul.f32 %v348, %v348
        %v377 = vmul.f32 %v349, %v349
        %v378 = vmul.f32 %v350, %v350
        %v379 = vsub.f32 %v371, %v375
        %v380 = vsub.f32 %v372, %v376
        %v381 = vsub.f32 %v373, %v377
        %v382 = vsub.f32 %v374, %v378
        %v383 = vadd.f32 %v379, 1e-05
        %v384 = vadd.f32 %v380, 1e-05
        %v385 = vadd.f32 %v381, 1e-05
        %v386 = vadd.f32 %v382, 1e-05
        %v387 = vrsqrt.pop %v383
        %v388 = vmul.f32 %v387, %v383
        %v389 = vmul.f32 %v388, %v387
        %v390 = vmul.f32 0.5, %v389
        %v391 = vsub.f32 1.5, %v390
        %v392 = vmul.f32 %v387, %v391
        %vm393 = vweird.f32 %v383
        %vm394 = vweird.f32 %v387
        %vm395 = vmor %vm393, %vm394
        %v396 = vsel %vm395, %v387, %v392
        %v397 = vrsqrt.pop %v384
        %v398 = vmul.f32 %v397, %v384
        %v399 = vmul.f32 %v398, %v397
        %v400 = vmul.f32 0.5, %v399
        %v401 = vsub.f32 1.5, %v400
        %v402 = vmul.f32 %v397, %v401
        %vm403 = vweird.f32 %v384
        %vm404 = vweird.f32 %v397
        %vm405 = vmor %vm403, %vm404
        %v406 = vsel %vm405, %v397, %v402
        %v407 = vrsqrt.pop %v385
        %v408 = vmul.f32 %v407, %v385
        %v409 = vmul.f32 %v408, %v407
        %v410 = vmul.f32 0.5, %v409
        %v411 = vsub.f32 1.5, %v410
        %v412 = vmul.f32 %v407, %v411
        %vm413 = vweird.f32 %v385
        %vm414 = vweird.f32 %v407
        %vm415 = vmor %vm413, %vm414
        %v416 = vsel %vm415, %v407, %v412
        %v417 = vrsqrt.pop %v386
        %v418 = vmul.f32 %v417, %v386
        %v419 = vmul.f32 %v418, %v417
        %v420 = vmul.f32 0.5, %v419
        %v421 = vsub.f32 1.5, %v420
        %v422 = vmul.f32 %v417, %v421
        %vm423 = vweird.f32 %v386
        %vm424 = vweird.f32 %v417
        %vm425 = vmor %vm423, %vm424
        %v426 = vsel %vm425, %v417, %v422
        %v427 = vsub.f32 %v288, %v347
        %v428 = vsub.f32 %v317, %v347
        %v429 = vsub.f32 %v291, %v348
        %v430 = vsub.f32 %v320, %v348
        %v431 = vsub.f32 %v294, %v349
        %v432 = vsub.f32 %v323, %v349
        %v433 = vsub.f32 %v297, %v350
        %v434 = vsub.f32 %v326, %v350
        %v435 = vperm.slane %v245, 1
        %v436 = vperm.slane %v246, 1
        %v437 = vmul.f32 %v396, %v435
        %v438 = vmul.f32 %v396, %v436
        %v439 = vmul.f32 %v406, %v435
        %v440 = vmul.f32 %v406, %v436
        %v441 = vmul.f32 %v416, %v435
        %v442 = vmul.f32 %v416, %v436
        %v443 = vmul.f32 %v426, %v435
        %v444 = vmul.f32 %v426, %v436
        %v445 = vmul.f32 %v427, %v437
        %v446 = vmul.f32 %v428, %v438
        %v447 = vmul.f32 %v429, %v439
        %v448 = vmul.f32 %v430, %v440
        %v449 = vmul.f32 %v431, %v441
        %v450 = vmul.f32 %v432, %v442
        %v451 = vmul.f32 %v433, %v443
        %v452 = vmul.f32 %v434, %v444
        %v453 = vperm.slane %v245, 2
        %v454 = vperm.slane %v246, 2
        %v455 = vadd.f32 %v445, %v453
        %v456 = vadd.f32 %v446, %v454
        %v457 = vadd.f32 %v447, %v453
        %v458 = vadd.f32 %v448, %v454
        %v459 = vadd.f32 %v449, %v453
        %v460 = vadd.f32 %v450, %v454
        %v461 = vadd.f32 %v451, %v453
        %v462 = vadd.f32 %v452, %v454
        %v463 = vmax.f32 %v455, 0.0
        %v464 = vmax.f32 %v456, 0.0
        %v465 = vmax.f32 %v457, 0.0
        %v466 = vmax.f32 %v458, 0.0
        %v467 = vmax.f32 %v459, 0.0
        %v468 = vmax.f32 %v460, 0.0
        %v469 = vmax.f32 %v461, 0.0
        %v470 = vmax.f32 %v462, 0.0
        %v471 = vld [vmem:[#allocation2] sm:$0xff]
        %v472 = vld [vmem:[#allocation2 + $0x8] sm:$0xff]
        %v473 = vld [vmem:[#allocation2 + $0x10] sm:$0xff]
        %v474 = vld [vmem:[#allocation2 + $0x18] sm:$0xff]
        %v475 = vld [vmem:[#allocation2 + $0x20] sm:$0xff]
        %v476 = vld [vmem:[#allocation2 + $0x28] sm:$0xff]
        %v477 = vld [vmem:[#allocation2 + $0x30] sm:$0xff]
        %v478 = vld [vmem:[#allocation2 + $0x38] sm:$0xff]
        %v479 = vld [vmem:[#allocation2 + $0x40] sm:$0xff]
        %v480 = vld [vmem:[#allocation2 + $0x48] sm:$0xff]
        %v481 = vld [vmem:[#allocation2 + $0x50] sm:$0xff]
        %v482 = vld [vmem:[#allocation2 + $0x58] sm:$0xff]
        %v483 = vld [vmem:[#allocation2 + $0x60] sm:$0xff]
        %v484 = vld [vmem:[#allocation2 + $0x68] sm:$0xff]
        %v485 = vld [vmem:[#allocation2 + $0x70] sm:$0xff]
        %v486 = vld [vmem:[#allocation2 + $0x78] sm:$0xff]
        %v487 = vld [vmem:[#allocation2 + $0x80] sm:$0xff]
        %v488 = vld [vmem:[#allocation2 + $0x88] sm:$0xff]
        %v489 = vld [vmem:[#allocation2 + $0x90] sm:$0xff]
        %v490 = vld [vmem:[#allocation2 + $0x98] sm:$0xff]
        %v491 = vld [vmem:[#allocation2 + $0xa0] sm:$0xff]
        %v492 = vld [vmem:[#allocation2 + $0xa8] sm:$0xff]
        %v493 = vld [vmem:[#allocation2 + $0xb0] sm:$0xff]
        %v494 = vld [vmem:[#allocation2 + $0xb8] sm:$0xff]
        %v495 = vld [vmem:[#allocation2 + $0xc0] sm:$0xff]
        %v496 = vld [vmem:[#allocation2 + $0xc8] sm:$0xff]
        %v497 = vld [vmem:[#allocation2 + $0xd0] sm:$0xff]
        %v498 = vld [vmem:[#allocation2 + $0xd8] sm:$0xff]
        %v499 = vld [vmem:[#allocation2 + $0xe0] sm:$0xff]
        %v500 = vld [vmem:[#allocation2 + $0xe8] sm:$0xff]
        %v501 = vld [vmem:[#allocation2 + $0xf0] sm:$0xff]
        %v502 = vld [vmem:[#allocation2 + $0xf8] sm:$0xff]
        %v503 = vld [vmem:[#allocation2 + $0x100] sm:$0xff]
        %v504 = vld [vmem:[#allocation2 + $0x108] sm:$0xff]
        %v505 = vld [vmem:[#allocation2 + $0x110] sm:$0xff]
        %v506 = vld [vmem:[#allocation2 + $0x118] sm:$0xff]
        %v507 = vld [vmem:[#allocation2 + $0x120] sm:$0xff]
        %v508 = vld [vmem:[#allocation2 + $0x128] sm:$0xff]
        %v509 = vld [vmem:[#allocation2 + $0x130] sm:$0xff]
        %v510 = vld [vmem:[#allocation2 + $0x138] sm:$0xff]
        %v511 = vld [vmem:[#allocation2 + $0x140] sm:$0xff]
        %v512 = vld [vmem:[#allocation2 + $0x148] sm:$0xff]
        %v513 = vld [vmem:[#allocation2 + $0x150] sm:$0xff]
        %v514 = vld [vmem:[#allocation2 + $0x158] sm:$0xff]
        %v515 = vld [vmem:[#allocation2 + $0x160] sm:$0xff]
        %v516 = vld [vmem:[#allocation2 + $0x168] sm:$0xff]
        %v517 = vld [vmem:[#allocation2 + $0x170] sm:$0xff]
        %v518 = vld [vmem:[#allocation2 + $0x178] sm:$0xff]
        %v519 = vld [vmem:[#allocation2 + $0x180] sm:$0xff]
        %v520 = vld [vmem:[#allocation2 + $0x188] sm:$0xff]
        %v521 = vld [vmem:[#allocation2 + $0x190] sm:$0xff]
        %v522 = vld [vmem:[#allocation2 + $0x198] sm:$0xff]
        %v523 = vld [vmem:[#allocation2 + $0x1a0] sm:$0xff]
        %v524 = vld [vmem:[#allocation2 + $0x1a8] sm:$0xff]
        %v525 = vld [vmem:[#allocation2 + $0x1b0] sm:$0xff]
        %v526 = vld [vmem:[#allocation2 + $0x1b8] sm:$0xff]
        %v527 = vld [vmem:[#allocation2 + $0x1c0] sm:$0xff]
        %v528 = vld [vmem:[#allocation2 + $0x1c8] sm:$0xff]
        %v529 = vld [vmem:[#allocation2 + $0x1d0] sm:$0xff]
        %v530 = vld [vmem:[#allocation2 + $0x1d8] sm:$0xff]
        %v531 = vld [vmem:[#allocation2 + $0x1e0] sm:$0xff]
        %v532 = vld [vmem:[#allocation2 + $0x1e8] sm:$0xff]
        %v533 = vld [vmem:[#allocation2 + $0x1f0] sm:$0xff]
        %v534 = vld [vmem:[#allocation2 + $0x1f8] sm:$0xff]
        %v535 = vperm.slane %v245, 3
        %v536 = vperm.slane %v246, 3
        %537 = vmatpush.msra.mxu0 %v501
        %538 = vmatpush.msra.mxu0 %v499
        %539 = vmatpush.msra.mxu0 %v497
        %540 = vmatpush.msra.mxu0 %v495
        %541 = vmatpush.msra.mxu0 %v493
        %542 = vmatpush.msra.mxu0 %v491
        %543 = vmatpush.msra.mxu0 %v489
        %544 = vmatpush.msra.mxu0 %v487
        %545 = vmatpush.msra.mxu0 %v485
        %546 = vmatpush.msra.mxu0 %v483
        %547 = vmatpush.msra.mxu0 %v481
        %548 = vmatpush.msra.mxu0 %v479
        %549 = vmatpush.msra.mxu0 %v477
        %550 = vmatpush.msra.mxu0 %v475
        %551 = vmatpush.msra.mxu0 %v473
        %552 = vmatpush.msra.mxu0 %v471
        %553 = vmatmul.f32.gmra.mxu0 %v463
        %v554 = vpop.f32.mrf.mxu0
        %v555 = vadd.f32 %v535, %v554
        %556 = vmatmul.f32.gmra.mxu0 %v465
        %v557 = vpop.f32.mrf.mxu0
        %v558 = vadd.f32 %v535, %v557
        %559 = vmatmul.f32.gmra.mxu0 %v467
        %v560 = vpop.f32.mrf.mxu0
        %v561 = vadd.f32 %v535, %v560
        %562 = vmatmul.f32.gmra.mxu0 %v469
        %v563 = vpop.f32.mrf.mxu0
        %v564 = vadd.f32 %v535, %v563
        %565 = vdwg.mxu0
        %566 = vmatpush.msra.mxu0 %v533
        %567 = vmatpush.msra.mxu0 %v531
        %568 = vmatpush.msra.mxu0 %v529
        %569 = vmatpush.msra.mxu0 %v527
        %570 = vmatpush.msra.mxu0 %v525
        %571 = vmatpush.msra.mxu0 %v523
        %572 = vmatpush.msra.mxu0 %v521
        %573 = vmatpush.msra.mxu0 %v519
        %574 = vmatpush.msra.mxu0 %v517
        %575 = vmatpush.msra.mxu0 %v515
        %576 = vmatpush.msra.mxu0 %v513
        %577 = vmatpush.msra.mxu0 %v511
        %578 = vmatpush.msra.mxu0 %v509
        %579 = vmatpush.msra.mxu0 %v507
        %580 = vmatpush.msra.mxu0 %v505
        %581 = vmatpush.msra.mxu0 %v503
        %582 = vmatmul.f32.gmra.mxu0 %v464
        %v583 = vpop.f32.mrf.mxu0
        %v584 = vadd.f32 %v555, %v583
        %585 = vmatmul.f32.gmra.mxu0 %v466
        %v586 = vpop.f32.mrf.mxu0
        %v587 = vadd.f32 %v558, %v586
        %588 = vmatmul.f32.gmra.mxu0 %v468
        %v589 = vpop.f32.mrf.mxu0
        %v590 = vadd.f32 %v561, %v589
        %591 = vmatmul.f32.gmra.mxu0 %v470
        %v592 = vpop.f32.mrf.mxu0
        %v593 = vadd.f32 %v564, %v592
        %594 = vdwg.mxu0
        %595 = vmatpush.msra.mxu0 %v502
        %596 = vmatpush.msra.mxu0 %v500
        %597 = vmatpush.msra.mxu0 %v498
        %598 = vmatpush.msra.mxu0 %v496
        %599 = vmatpush.msra.mxu0 %v494
        %600 = vmatpush.msra.mxu0 %v492
        %601 = vmatpush.msra.mxu0 %v490
        %602 = vmatpush.msra.mxu0 %v488
        %603 = vmatpush.msra.mxu0 %v486
        %604 = vmatpush.msra.mxu0 %v484
        %605 = vmatpush.msra.mxu0 %v482
        %606 = vmatpush.msra.mxu0 %v480
        %607 = vmatpush.msra.mxu0 %v478
        %608 = vmatpush.msra.mxu0 %v476
        %609 = vmatpush.msra.mxu0 %v474
        %610 = vmatpush.msra.mxu0 %v472
        %611 = vmatmul.f32.gmra.mxu0 %v463
        %v612 = vpop.f32.mrf.mxu0
        %v613 = vadd.f32 %v536, %v612
        %614 = vmatmul.f32.gmra.mxu0 %v465
        %v615 = vpop.f32.mrf.mxu0
        %v616 = vadd.f32 %v536, %v615
        %617 = vmatmul.f32.gmra.mxu0 %v467
        %v618 = vpop.f32.mrf.mxu0
        %v619 = vadd.f32 %v536, %v618
        %620 = vmatmul.f32.gmra.mxu0 %v469
        %v621 = vpop.f32.mrf.mxu0
        %v622 = vadd.f32 %v536, %v621
        %623 = vdwg.mxu0
        %624 = vmatpush.msra.mxu0 %v534
        %625 = vmatpush.msra.mxu0 %v532
        %626 = vmatpush.msra.mxu0 %v530
        %627 = vmatpush.msra.mxu0 %v528
        %628 = vmatpush.msra.mxu0 %v526
        %629 = vmatpush.msra.mxu0 %v524
        %630 = vmatpush.msra.mxu0 %v522
        %631 = vmatpush.msra.mxu0 %v520
        %632 = vmatpush.msra.mxu0 %v518
        %633 = vmatpush.msra.mxu0 %v516
        %634 = vmatpush.msra.mxu0 %v514
        %635 = vmatpush.msra.mxu0 %v512
        %636 = vmatpush.msra.mxu0 %v510
        %637 = vmatpush.msra.mxu0 %v508
        %638 = vmatpush.msra.mxu0 %v506
        %639 = vmatpush.msra.mxu0 %v504
        %640 = vmatmul.f32.gmra.mxu0 %v464
        %v641 = vpop.f32.mrf.mxu0
        %v642 = vadd.f32 %v613, %v641
        %643 = vmatmul.f32.gmra.mxu0 %v466
        %v644 = vpop.f32.mrf.mxu0
        %v645 = vadd.f32 %v616, %v644
        %646 = vmatmul.f32.gmra.mxu0 %v468
        %v647 = vpop.f32.mrf.mxu0
        %v648 = vadd.f32 %v619, %v647
        %649 = vmatmul.f32.gmra.mxu0 %v470
        %v650 = vpop.f32.mrf.mxu0
        %v651 = vadd.f32 %v622, %v650
        %652 = vdwg.mxu0
        %v653 = vadd.f32 %v584, %v642
        %654 = vadd.xlane.f32.xlu0 %v653
        %v655 = vpop.xlane.xlu0 %654
        %v656 = vadd.f32 %v587, %v645
        %657 = vadd.xlane.f32.xlu0 %v656
        %v658 = vpop.xlane.xlu0 %657
        %v659 = vadd.f32 %v590, %v648
        %660 = vadd.xlane.f32.xlu0 %v659
        %v661 = vpop.xlane.xlu0 %660
        %v662 = vadd.f32 %v593, %v651
        %663 = vadd.xlane.f32.xlu0 %v662
        %v664 = vpop.xlane.xlu0 %663
        %v665 = vmul.f32 %v655, %v346
        %v666 = vmul.f32 %v658, %v346
        %v667 = vmul.f32 %v661, %v346
        %v668 = vmul.f32 %v664, %v346
        %v669 = vmul.f32 %v584, %v584
        %v670 = vmul.f32 %v642, %v642
        %v671 = vmul.f32 %v587, %v587
        %v672 = vmul.f32 %v645, %v645
        %v673 = vmul.f32 %v590, %v590
        %v674 = vmul.f32 %v648, %v648
        %v675 = vmul.f32 %v593, %v593
        %v676 = vmul.f32 %v651, %v651
        %v677 = vadd.f32 %v669, %v670
        %678 = vadd.xlane.f32.xlu0 %v677
        %v679 = vpop.xlane.xlu0 %678
        %v680 = vadd.f32 %v671, %v672
        %681 = vadd.xlane.f32.xlu0 %v680
        %v682 = vpop.xlane.xlu0 %681
        %v683 = vadd.f32 %v673, %v674
        %684 = vadd.xlane.f32.xlu0 %v683
        %v685 = vpop.xlane.xlu0 %684
        %v686 = vadd.f32 %v675, %v676
        %687 = vadd.xlane.f32.xlu0 %v686
        %v688 = vpop.xlane.xlu0 %687
        %v689 = vmul.f32 %v679, %v346
        %v690 = vmul.f32 %v682, %v346
        %v691 = vmul.f32 %v685, %v346
        %v692 = vmul.f32 %v688, %v346
        %v693 = vmul.f32 %v665, %v665
        %v694 = vmul.f32 %v666, %v666
        %v695 = vmul.f32 %v667, %v667
        %v696 = vmul.f32 %v668, %v668
        %v697 = vsub.f32 %v689, %v693
        %v698 = vsub.f32 %v690, %v694
        %v699 = vsub.f32 %v691, %v695
        %v700 = vsub.f32 %v692, %v696
        %v701 = vadd.f32 %v697, 1e-05
        %v702 = vadd.f32 %v698, 1e-05
        %v703 = vadd.f32 %v699, 1e-05
        %v704 = vadd.f32 %v700, 1e-05
        %v705 = vrsqrt.pop %v701
        %v706 = vmul.f32 %v705, %v701
        %v707 = vmul.f32 %v706, %v705
        %v708 = vmul.f32 0.5, %v707
        %v709 = vsub.f32 1.5, %v708
        %v710 = vmul.f32 %v705, %v709
        %vm711 = vweird.f32 %v701
        %vm712 = vweird.f32 %v705
        %vm713 = vmor %vm711, %vm712
        %v714 = vsel %vm713, %v705, %v710
        %v715 = vrsqrt.pop %v702
        %v716 = vmul.f32 %v715, %v702
        %v717 = vmul.f32 %v716, %v715
        %v718 = vmul.f32 0.5, %v717
        %v719 = vsub.f32 1.5, %v718
        %v720 = vmul.f32 %v715, %v719
        %vm721 = vweird.f32 %v702
        %vm722 = vweird.f32 %v715
        %vm723 = vmor %vm721, %vm722
        %v724 = vsel %vm723, %v715, %v720
        %v725 = vrsqrt.pop %v703
        %v726 = vmul.f32 %v725, %v703
        %v727 = vmul.f32 %v726, %v725
        %v728 = vmul.f32 0.5, %v727
        %v729 = vsub.f32 1.5, %v728
        %v730 = vmul.f32 %v725, %v729
        %vm731 = vweird.f32 %v703
        %vm732 = vweird.f32 %v725
        %vm733 = vmor %vm731, %vm732
        %v734 = vsel %vm733, %v725, %v730
        %v735 = vrsqrt.pop %v704
        %v736 = vmul.f32 %v735, %v704
        %v737 = vmul.f32 %v736, %v735
        %v738 = vmul.f32 0.5, %v737
        %v739 = vsub.f32 1.5, %v738
        %v740 = vmul.f32 %v735, %v739
        %vm741 = vweird.f32 %v704
        %vm742 = vweird.f32 %v735
        %vm743 = vmor %vm741, %vm742
        %v744 = vsel %vm743, %v735, %v740
        %v745 = vsub.f32 %v584, %v665
        %v746 = vsub.f32 %v642, %v665
        %v747 = vsub.f32 %v587, %v666
        %v748 = vsub.f32 %v645, %v666
        %v749 = vsub.f32 %v590, %v667
        %v750 = vsub.f32 %v648, %v667
        %v751 = vsub.f32 %v593, %v668
        %v752 = vsub.f32 %v651, %v668
        %v753 = vperm.slane %v245, 4
        %v754 = vperm.slane %v246, 4
        %v755 = vmul.f32 %v714, %v753
        %v756 = vmul.f32 %v714, %v754
        %v757 = vmul.f32 %v724, %v753
        %v758 = vmul.f32 %v724, %v754
        %v759 = vmul.f32 %v734, %v753
        %v760 = vmul.f32 %v734, %v754
        %v761 = vmul.f32 %v744, %v753
        %v762 = vmul.f32 %v744, %v754
        %v763 = vmul.f32 %v745, %v755
        %v764 = vmul.f32 %v746, %v756
        %v765 = vmul.f32 %v747, %v757
        %v766 = vmul.f32 %v748, %v758
        %v767 = vmul.f32 %v749, %v759
        %v768 = vmul.f32 %v750, %v760
        %v769 = vmul.f32 %v751, %v761
        %v770 = vmul.f32 %v752, %v762
        %v771 = vperm.slane %v245, 5
        %v772 = vperm.slane %v246, 5
        %v773 = vadd.f32 %v763, %v771
        %v774 = vadd.f32 %v764, %v772
        %v775 = vadd.f32 %v765, %v771
        %v776 = vadd.f32 %v766, %v772
        %v777 = vadd.f32 %v767, %v771
        %v778 = vadd.f32 %v768, %v772
        %v779 = vadd.f32 %v769, %v771
        %v780 = vadd.f32 %v770, %v772
        %v781 = vmax.f32 %v773, 0.0
        %v782 = vmax.f32 %v774, 0.0
        %v783 = vmax.f32 %v775, 0.0
        %v784 = vmax.f32 %v776, 0.0
        %v785 = vmax.f32 %v777, 0.0
        %v786 = vmax.f32 %v778, 0.0
        %v787 = vmax.f32 %v779, 0.0
        %v788 = vmax.f32 %v780, 0.0
        %v789 = vld [vmem:[%s3] sm:$0xff]
        %v790 = vld [vmem:[%s3 + $0x8] sm:$0xff]
        %v791 = vld [vmem:[%s3 + $0x10] sm:$0xff]
        %v792 = vld [vmem:[%s3 + $0x18] sm:$0xff]
        %v793 = vld [vmem:[%s3 + $0x20] sm:$0xff]
        %v794 = vld [vmem:[%s3 + $0x28] sm:$0xff]
        %v795 = vld [vmem:[%s3 + $0x30] sm:$0xff]
        %v796 = vld [vmem:[%s3 + $0x38] sm:$0xff]
        %v797 = vld [vmem:[%s3 + $0x40] sm:$0xff]
        %v798 = vld [vmem:[%s3 + $0x48] sm:$0xff]
        %v799 = vld [vmem:[%s3 + $0x50] sm:$0xff]
        %v800 = vld [vmem:[%s3 + $0x58] sm:$0xff]
        %v801 = vld [vmem:[%s3 + $0x60] sm:$0xff]
        %v802 = vld [vmem:[%s3 + $0x68] sm:$0xff]
        %v803 = vld [vmem:[%s3 + $0x70] sm:$0xff]
        %v804 = vld [vmem:[%s3 + $0x78] sm:$0xff]
        %v805 = vld [vmem:[%s3 + $0x80] sm:$0xff]
        %v806 = vld [vmem:[%s3 + $0x88] sm:$0xff]
        %v807 = vld [vmem:[%s3 + $0x90] sm:$0xff]
        %v808 = vld [vmem:[%s3 + $0x98] sm:$0xff]
        %v809 = vld [vmem:[%s3 + $0xa0] sm:$0xff]
        %v810 = vld [vmem:[%s3 + $0xa8] sm:$0xff]
        %v811 = vld [vmem:[%s3 + $0xb0] sm:$0xff]
        %v812 = vld [vmem:[%s3 + $0xb8] sm:$0xff]
        %v813 = vld [vmem:[%s3 + $0xc0] sm:$0xff]
        %v814 = vld [vmem:[%s3 + $0xc8] sm:$0xff]
        %v815 = vld [vmem:[%s3 + $0xd0] sm:$0xff]
        %v816 = vld [vmem:[%s3 + $0xd8] sm:$0xff]
        %v817 = vld [vmem:[%s3 + $0xe0] sm:$0xff]
        %v818 = vld [vmem:[%s3 + $0xe8] sm:$0xff]
        %v819 = vld [vmem:[%s3 + $0xf0] sm:$0xff]
        %v820 = vld [vmem:[%s3 + $0xf8] sm:$0xff]
        %v821 = vperm.slane %v245, 6
        %822 = vmatpush.msra.mxu0 %v804
        %823 = vmatpush.msra.mxu0 %v803
        %824 = vmatpush.msra.mxu0 %v802
        %825 = vmatpush.msra.mxu0 %v801
        %826 = vmatpush.msra.mxu0 %v800
        %827 = vmatpush.msra.mxu0 %v799
        %828 = vmatpush.msra.mxu0 %v798
        %829 = vmatpush.msra.mxu0 %v797
        %830 = vmatpush.msra.mxu0 %v796
        %831 = vmatpush.msra.mxu0 %v795
        %832 = vmatpush.msra.mxu0 %v794
        %833 = vmatpush.msra.mxu0 %v793
        %834 = vmatpush.msra.mxu0 %v792
        %835 = vmatpush.msra.mxu0 %v791
        %836 = vmatpush.msra.mxu0 %v790
        %837 = vmatpush.msra.mxu0 %v789
        %838 = vmatmul.f32.gmra.mxu0 %v781
        %v839 = vpop.f32.mrf.mxu0
        %v840 = vadd.f32 %v821, %v839
        %841 = vmatmul.f32.gmra.mxu0 %v783
        %v842 = vpop.f32.mrf.mxu0
        %v843 = vadd.f32 %v821, %v842
        %844 = vmatmul.f32.gmra.mxu0 %v785
        %v845 = vpop.f32.mrf.mxu0
        %v846 = vadd.f32 %v821, %v845
        %847 = vmatmul.f32.gmra.mxu0 %v787
        %v848 = vpop.f32.mrf.mxu0
        %v849 = vadd.f32 %v821, %v848
        %850 = vdwg.mxu0
        %851 = vmatpush.msra.mxu0 %v820
        %852 = vmatpush.msra.mxu0 %v819
        %853 = vmatpush.msra.mxu0 %v818
        %854 = vmatpush.msra.mxu0 %v817
        %855 = vmatpush.msra.mxu0 %v816
        %856 = vmatpush.msra.mxu0 %v815
        %857 = vmatpush.msra.mxu0 %v814
        %858 = vmatpush.msra.mxu0 %v813
        %859 = vmatpush.msra.mxu0 %v812
        %860 = vmatpush.msra.mxu0 %v811
        %861 = vmatpush.msra.mxu0 %v810
        %862 = vmatpush.msra.mxu0 %v809
        %863 = vmatpush.msra.mxu0 %v808
        %864 = vmatpush.msra.mxu0 %v807
        %865 = vmatpush.msra.mxu0 %v806
        %866 = vmatpush.msra.mxu0 %v805
        %867 = vmatmul.f32.gmra.mxu0 %v782
        %v868 = vpop.f32.mrf.mxu0
        %v869 = vadd.f32 %v840, %v868
        %870 = vmatmul.f32.gmra.mxu0 %v784
        %v871 = vpop.f32.mrf.mxu0
        %v872 = vadd.f32 %v843, %v871
        %873 = vmatmul.f32.gmra.mxu0 %v786
        %v874 = vpop.f32.mrf.mxu0
        %v875 = vadd.f32 %v846, %v874
        %876 = vmatmul.f32.gmra.mxu0 %v788
        %v877 = vpop.f32.mrf.mxu0
        %v878 = vadd.f32 %v849, %v877
        %879 = vdwg.mxu0
        %vm880 = vcmask 64512
        %v881 = vsel %vm880, %v869, -inf
        %882 = vmax.xlane.f32.xlu0 %v881
        %v883 = vpop.xlane.xlu0 %882
        %v884 = vsel %vm880, %v872, -inf
        %885 = vmax.xlane.f32.xlu0 %v884
        %v886 = vpop.xlane.xlu0 %885
        %v887 = vsel %vm880, %v875, -inf
        %888 = vmax.xlane.f32.xlu0 %v887
        %v889 = vpop.xlane.xlu0 %888
        %v890 = vsel %vm880, %v878, -inf
        %891 = vmax.xlane.f32.xlu0 %v890
        %v892 = vpop.xlane.xlu0 %891
        %v893 = vsub.f32 %v869, %v883
        %v894 = vsub.f32 %v872, %v886
        %v895 = vsub.f32 %v875, %v889
        %v896 = vsub.f32 %v878, %v892
        %v897 = vmul.f32 %v893, 1.442695
        %v898 = vpow.pop %v897
        %v899 = vmul.f32 %v894, 1.442695
        %v900 = vpow.pop %v899
        %v901 = vmul.f32 %v895, 1.442695
        %v902 = vpow.pop %v901
        %v903 = vmul.f32 %v896, 1.442695
        %v904 = vpow.pop %v903
        %v905 = vsel %vm880, %v898, 0.0
        %906 = vadd.xlane.f32.xlu0 %v905
        %v907 = vpop.xlane.xlu0 %906
        %v908 = vsel %vm880, %v900, 0.0
        %909 = vadd.xlane.f32.xlu0 %v908
        %v910 = vpop.xlane.xlu0 %909
        %v911 = vsel %vm880, %v902, 0.0
        %912 = vadd.xlane.f32.xlu0 %v911
        %v913 = vpop.xlane.xlu0 %912
        %v914 = vsel %vm880, %v904, 0.0
        %915 = vadd.xlane.f32.xlu0 %v914
        %v916 = vpop.xlane.xlu0 %915
        %v917 = vrcp.pop %v907
        %v918 = vmul.f32 %v907, %v917
        %v919 = vsub.f32 1.0, %v918
        %v920 = vmul.f32 %v917, %v919
        %v921 = vadd.f32 %v917, %v920
        %vm922 = vweird.f32 %v907
        %vm923 = vweird.f32 %v917
        %vm924 = vmor %vm922, %vm923
        %v925 = vsel %vm924, %v917, %v921
        %v926 = vand.u32 2147483647, %v907
        %vm927 = vcmp.eq.f32.partialorder %v926, 8.507059e+37
        %v928 = vand.u32 %v907, 2147483648
        %v929 = vor.u32 1.1754944e-38, %v928
        %v930 = vsel %vm927, %v929, %v925
        %v931 = vmul.f32 %v898, %v930
        %v932 = vrcp.pop %v910
        %v933 = vmul.f32 %v910, %v932
        %v934 = vsub.f32 1.0, %v933
        %v935 = vmul.f32 %v932, %v934
        %v936 = vadd.f32 %v932, %v935
        %vm937 = vweird.f32 %v910
        %vm938 = vweird.f32 %v932
        %vm939 = vmor %vm937, %vm938
        %v940 = vsel %vm939, %v932, %v936
        %v941 = vand.u32 2147483647, %v910
        %vm942 = vcmp.eq.f32.partialorder %v941, 8.507059e+37
        %v943 = vand.u32 %v910, 2147483648
        %v944 = vor.u32 1.1754944e-38, %v943
        %v945 = vsel %vm942, %v944, %v940
        %v946 = vmul.f32 %v900, %v945
        %v947 = vrcp.pop %v913
        %v948 = vmul.f32 %v913, %v947
        %v949 = vsub.f32 1.0, %v948
        %v950 = vmul.f32 %v947, %v949
        %v951 = vadd.f32 %v947, %v950
        %vm952 = vweird.f32 %v913
        %vm953 = vweird.f32 %v947
        %vm954 = vmor %vm952, %vm953
        %v955 = vsel %vm954, %v947, %v951
        %v956 = vand.u32 2147483647, %v913
        %vm957 = vcmp.eq.f32.partialorder %v956, 8.507059e+37
        %v958 = vand.u32 %v913, 2147483648
        %v959 = vor.u32 1.1754944e-38, %v958
        %v960 = vsel %vm957, %v959, %v955
        %v961 = vmul.f32 %v902, %v960
        %v962 = vrcp.pop %v916
        %v963 = vmul.f32 %v916, %v962
        %v964 = vsub.f32 1.0, %v963
        %v965 = vmul.f32 %v962, %v964
        %v966 = vadd.f32 %v962, %v965
        %vm967 = vweird.f32 %v916
        %vm968 = vweird.f32 %v962
        %vm969 = vmor %vm967, %vm968
        %v970 = vsel %vm969, %v962, %v966
        %v971 = vand.u32 2147483647, %v916
        %vm972 = vcmp.eq.f32.partialorder %v971, 8.507059e+37
        %v973 = vand.u32 %v916, 2147483648
        %v974 = vor.u32 1.1754944e-38, %v973
        %v975 = vsel %vm972, %v974, %v970
        %v976 = vmul.f32 %v904, %v975
        %977 = vst.msk [vmem:[%s243] sm:$0xff] %vm880, %v931
        %978 = vst.msk [vmem:[%s243 + $0x8] sm:$0xff] %vm880, %v946
        %979 = vst.msk [vmem:[%s243 + $0x10] sm:$0xff] %vm880, %v961
        %980 = vst.msk [vmem:[%s243 + $0x18] sm:$0xff] %vm880, %v976
        %s981 = smul.u32 4, %s17
        %p982 = scmp.lt.s32.totalorder %s981, 7
        %s983 = scalar_select %p982, %s981, 7
        %s984 = smul.addr %s983, 8
        %s985 = scalar_lea.vmem %s5, %s984
        // Predicated region
        $region45: #{actor_forward.1} parent=39 // pred_check
          %p986 = pneg %p145
        $region46: #{actor_forward.1} parent=39 // pred_check_branch
          %988 = sbr.rel (%p986) target = $region48
        $region47: #{actor_forward.1} parent=39 // pred_region
          %s989 = smul.u32 4, %s17
        $region48: #{actor_forward.1} parent=39 // pred_fallthru
          _
      $region40: #{actor_forward.1} parent=5 // pred_fallthru
        _
      %p990 = scmp.le.s32.totalorder 2, %s12
      // Predicated region
      $region49: #{actor_forward.1} parent=5 // pred_check
        %p991 = pneg %p990
      $region50: #{actor_forward.1} parent=5 // pred_check_branch
        %993 = sbr.rel (%p991) target = $region52
      $region51: #{actor_forward.1} parent=5 // pred_region
        %s994 = ssub.s32 %s12, 2
        // Predicated region
        $region53: #{actor_forward.1} parent=51 // pred_check
          %p995 = pneg %p151
        $region54: #{actor_forward.1} parent=51 // pred_check_branch
          %997 = sbr.rel (%p995) target = $region56
        $region55: #{actor_forward.1} parent=51 // pred_region
          %s998 = smul.u32 4, %s18
          %p999 = scmp.lt.s32.totalorder %s998, 7
          %s1000 = scalar_select %p999, %s998, 7
          %s1001 = smul.addr %s1000, 8
          %s1002 = scalar_lea.vmem %s5, %s1001
        $region56: #{actor_forward.1} parent=51 // pred_fallthru
          _
      $region52: #{actor_forward.1} parent=5 // pred_fallthru
        _
    $region6: #{actor_forward.1} parent=1 // loop_footer
      %s16 = sadd.s32 1, %s12
    $region7: #{actor_forward.1} parent=1 // loop_footer_branch
      %11 = sbr.rel target = $region3
    $region8: #{actor_forward.1} parent=1 // loop_exit
      _
    %1003 = vsyncpa [#allocation3], 1
    %s1004 = scalar_lea.sflag [#allocation3], 1
    %1005 = vsyncpa %s1004, 1

</llo_original>
